<compile_context>
chip_gen: v5e
topology: v5e:2x2
jax: 0.10.0
libtpu: 0.0.40
codegen_flags: <defaults>
</compile_context>

<pallas_src>
import jax
import jax.numpy as jnp
from jax import lax
from jax.experimental import pallas as pl
from jax.experimental.pallas import tpu as pltpu


def _round_up(n, m):
    return ((n + m - 1) // m) * m


# --------------------------------------------------------------------------
# Small path: whole problem in VMEM, single kernel invocation, no grid.
# --------------------------------------------------------------------------
def _fc_small_kernel(x_ref, w_ref, b_ref, o_ref):
    # x_ref: [B, D]  w_ref: [A, D]  b_ref: [1, A]  o_ref: [B, A]
    acc = lax.dot_general(
        x_ref[...], w_ref[...],
        dimension_numbers=(((1,), (1,)), ((), ())),   # contract D with D
        preferred_element_type=jnp.float32)
    o_ref[...] = (acc + b_ref[...]).astype(o_ref.dtype)


def _fc_single_block(x_flat, weight, b2):
    B, D = x_flat.shape
    A = weight.shape[0]
    return pl.pallas_call(
        _fc_small_kernel,
        out_shape=jax.ShapeDtypeStruct((B, A), x_flat.dtype),
        in_specs=[
            pl.BlockSpec(memory_space=pltpu.MemorySpace.VMEM),
            pl.BlockSpec(memory_space=pltpu.MemorySpace.VMEM),
            pl.BlockSpec(memory_space=pltpu.MemorySpace.VMEM),
        ],
        out_specs=pl.BlockSpec(memory_space=pltpu.MemorySpace.VMEM),
    )(x_flat, weight, b2)


# --------------------------------------------------------------------------
# Tiled path: used when D / A / B are large enough that a single VMEM block
# would be wasteful or overflow the scoped VMEM limit.
# --------------------------------------------------------------------------
def _fc_tiled_kernel(x_ref, w_ref, b_ref, o_ref, acc_ref):
    # x_ref: [tm, tk]  w_ref: [tn, tk]  b_ref: [1, tn]  o_ref: [tm, tn]
    k = pl.program_id(2)

    @pl.when(k == 0)
    def _():
        acc_ref[...] = jnp.zeros_like(acc_ref)

    acc_ref[...] += lax.dot_general(
        x_ref[...], w_ref[...],
        dimension_numbers=(((1,), (1,)), ((), ())),
        preferred_element_type=jnp.float32)

    @pl.when(k == pl.num_programs(2) - 1)
    def _():
        o_ref[...] = (acc_ref[...] + b_ref[...]).astype(o_ref.dtype)


def _fc_tiled(x_flat, weight, b2, *, tm=128, tn=256, tk=256):
    B, D = x_flat.shape
    A = weight.shape[0]

    # Shrink tiles for smaller problems (keep (8,128) alignment).
    tm = min(tm, _round_up(B, 8))
    tn = min(tn, _round_up(A, 128))
    tk = min(tk, _round_up(D, 128))

    Bp, Ap, Dp = _round_up(B, tm), _round_up(A, tn), _round_up(D, tk)
    # Zero-pad to tile multiples (no-op when already aligned). Zero padding
    # along K is exact; padded rows/cols are sliced off at the end.
    x_p = x_flat if (Bp, Dp) == (B, D) else jnp.pad(
        x_flat, ((0, Bp - B), (0, Dp - D)))
    w_p = weight if (Ap, Dp) == (A, D) else jnp.pad(
        weight, ((0, Ap - A), (0, Dp - D)))
    b_p = b2 if Ap == A else jnp.pad(b2, ((0, 0), (0, Ap - A)))

    out_p = pl.pallas_call(
        _fc_tiled_kernel,
        out_shape=jax.ShapeDtypeStruct((Bp, Ap), x_flat.dtype),
        grid_spec=pltpu.PrefetchScalarGridSpec(
            num_scalar_prefetch=0,
            grid=(Bp // tm, Ap // tn, Dp // tk),
            in_specs=[
                pl.BlockSpec((tm, tk), lambda i, j, k: (i, k)),   # activations
                pl.BlockSpec((tn, tk), lambda i, j, k: (j, k)),   # weight [A,D]
                pl.BlockSpec((1, tn), lambda i, j, k: (0, j)),    # bias
            ],
            out_specs=pl.BlockSpec((tm, tn), lambda i, j, k: (i, j)),
            scratch_shapes=[pltpu.VMEM((tm, tn), jnp.float32)],
        ),
        compiler_params=pltpu.CompilerParams(
            dimension_semantics=("parallel", "parallel", "arbitrary")),
    )(x_p, w_p, b_p)

    if (Bp, Ap) == (B, A):
        return out_p
    return out_p[:B, :A]


# --------------------------------------------------------------------------
# Public forward: matches FC.forward (flatten -> Linear, no ReLU).
# --------------------------------------------------------------------------
def fc_forward(x, weight, bias, *, tiled=None):
    """x: [B, C, 4, 4]; weight: [A, C*16] (nn.Linear layout); bias: [A]."""
    B = x.shape[0]
    D = x.shape[1] * x.shape[2] * x.shape[3]
    A = weight.shape[0]

    x_flat = x.reshape(B, D)        # same element order as torch .view on NCHW
    b2 = bias.reshape(1, A)

    if tiled is None:
        # Single-block path while everything fits comfortably in scoped VMEM
        # (stay well under v5e's 16 MiB default scope).
        footprint_bytes = 4 * (B * D + A * D + A + B * A)
        tiled = footprint_bytes > (8 << 20)

    if not tiled:
        return _fc_single_block(x_flat, weight, b2)
    return _fc_tiled(x_flat, weight, b2)


if __name__ == "__main__":
    key = jax.random.PRNGKey(0)
    k_x, k_w, k_b, k_x2, k_w2, k_b2 = jax.random.split(key, 6)

    # ---- Small config implied by the module (in_channels=4, num_actions=8).
    in_channels, num_actions, batch = 4, 8, 2
    input_dim = in_channels * 4 * 4  # 64
    bound = 1.0 / jnp.sqrt(input_dim)
    weight = jax.random.uniform(
        k_w, (num_actions, input_dim), jnp.float32, -bound, bound)
    bias = jax.random.uniform(
        k_b, (num_actions,), jnp.float32, -bound, bound)
    x = jax.random.normal(k_x, (batch, in_channels, 4, 4), jnp.float32)

    out = jax.block_until_ready(fc_forward(x, weight, bias))
    ref = x.reshape(batch, -1) @ weight.T + bias
    assert out.shape == (batch, num_actions)
    assert jnp.allclose(out, ref, atol=1e-5, rtol=1e-5)

    # ---- Sanity-check the tiled path (exercises padding + K accumulation).
    B2, C2, A2 = 250, 32, 200          # D2 = 512
    D2 = C2 * 16
    bound2 = 1.0 / jnp.sqrt(D2)
    w2 = jax.random.uniform(k_w2, (A2, D2), jnp.float32, -bound2, bound2)
    b2v = jax.random.uniform(k_b2, (A2,), jnp.float32, -bound2, bound2)
    x2 = jax.random.normal(k_x2, (B2, C2, 4, 4), jnp.float32)

    out2 = jax.block_until_ready(fc_forward(x2, w2, b2v, tiled=True))
    ref2 = jnp.dot(x2.reshape(B2, -1), w2.T,
                   precision=jax.lax.Precision.HIGHEST) + b2v
    assert out2.shape == (B2, A2)
    assert jnp.allclose(out2, ref2, atol=1e-2, rtol=1e-2)

    print("KERNEL_OK")
</pallas_src>

<mosaic_0001>
module attributes {stable_mosaic.version = 11 : i64} {
  func.func @_fc_small_kernel(%arg0: memref<2x64xf32, #tpu.memory_space<vmem>>, %arg1: memref<8x64xf32, #tpu.memory_space<vmem>>, %arg2: memref<1x8xf32, #tpu.memory_space<vmem>>, %arg3: memref<2x8xf32, #tpu.memory_space<vmem>>) attributes {dimension_semantics = [], scalar_prefetch = 0 : i64, scratch_operands = 0 : i64, tpu.core_type = #tpu.core_type<tc>} {
    %c0 = arith.constant 0 : index
    %c0_0 = arith.constant 0 : index
    %0 = vector.load %arg0[%c0, %c0_0] : memref<2x64xf32, #tpu.memory_space<vmem>>, vector<2x64xf32>
    %c0_1 = arith.constant 0 : index
    %c0_2 = arith.constant 0 : index
    %1 = vector.load %arg1[%c0_1, %c0_2] : memref<8x64xf32, #tpu.memory_space<vmem>>, vector<8x64xf32>
    %cst = arith.constant dense<0.000000e+00> : vector<2x8xf32>
    %2 = tpu.matmul %0, %1, %cst {dimension_numbers = #tpu.dot_dimension_numbers<[1], [1], [0], [0], [0, 0, 1, 0], [], []>} : vector<2x64xf32>, vector<8x64xf32>, vector<2x8xf32> -> vector<2x8xf32>
    %c0_3 = arith.constant 0 : index
    %c0_4 = arith.constant 0 : index
    %3 = vector.load %arg2[%c0_3, %c0_4] : memref<1x8xf32, #tpu.memory_space<vmem>>, vector<1x8xf32>
    %4 = vector.broadcast %3 : vector<1x8xf32> to vector<2x8xf32>
    %5 = arith.addf %2, %4 : vector<2x8xf32>
    %c0_5 = arith.constant 0 : index
    %c0_6 = arith.constant 0 : index
    %6 = vector.load %arg3[%c0_5, %c0_6] : memref<2x8xf32, #tpu.memory_space<vmem>>, vector<2x8xf32>
    tpu.vector_store %arg3[%c0_5, %c0_6], %5 {strides = array<i32>} : memref<2x8xf32, #tpu.memory_space<vmem>>, vector<2x8xf32>,
    return
  }
}

</mosaic_0001>

<llo_original>
// kernel: tpu_custom_call.1
$region0: #{tpu_custom_call.1}
  #allocation0 [shape = 'u32[]', space=smem, size = 0x4, offset = 0x4, fixed_abs, tag = 'smem constant byte address 0x4 - core index']
  #allocation1 [shape = 'u32[72,128]{1,0:T(1,128)}', space=vmem, size = 0x9000, scoped, tag = 'internal scratch']
  %s0 = inlined_call_operand.hbm [shape: f32[2,64], index: 0, kind: input, shape index: {}]
  %s1 = inlined_call_operand.hbm [shape: f32[8,64], index: 1, kind: input, shape index: {}]
  %s2 = inlined_call_operand.vmem [shape: f32[1,8], index: 2, kind: input, shape index: {}]
  %s3 = inlined_call_operand.hbm [shape: f32[2,8], index: 3, kind: output, shape index: {}]
  %s4 = sld [smem:[#allocation0]]
  $region30: #{tpu_custom_call.1} parent=0
    _
  %s6 = ssub.s32 1, %s4
  %s7 = scalar_select 0, %s6, %s4
  $region1: #{tpu_custom_call.1} parent=0
    #allocation2 [shape = 'u8[1024]{0}', space=vmem, size = 0x400, scoped, tag = 'input window, operand 0, single buffered']
    #allocation3 [shape = 's32[1]{0}', space=sflag, size = 0x4, scoped, tag = 'scoped memory for tpu_custom_call.1']
    #allocation4 [shape = 's32[1]{0}', space=sflag, size = 0x4, scoped, tag = 'scoped memory for tpu_custom_call.1']
    #allocation5 [shape = 'u8[4096]{0}', space=vmem, size = 0x1000, scoped, tag = 'input window, operand 1, single buffered']
    #allocation6 [shape = 's32[1]{0}', space=sflag, size = 0x4, scoped, tag = 'scoped memory for tpu_custom_call.1']
    #allocation7 [shape = 'u8[1024]{0}', space=vmem, size = 0x400, scoped, tag = 'output window, operand 0, single buffered']
    %8 = vsyncpa [#allocation3], 0
    %9 = vsyncpa [#allocation6], 0
    %10 = vsyncpa [#allocation4], 0
    // Predicated region
    $region2: #{tpu_custom_call.1} parent=1 // pred_check
      _
    $region3: #{tpu_custom_call.1} parent=1 // pred_check_branch
      %12 = sbr.rel (0) target = $region5
    $region4: #{tpu_custom_call.1} parent=1 // pred_region
      %14 = vsyncadd [#allocation3], 0
      %s16 = sshll.u32 %s0, 4
      %s17 = int_to_ptr.hbm [resolvable:$true] %s16
      %s18 = sshll.u32 [#allocation2], 4
      %s19 = int_to_ptr.vmem [resolvable:$true] %s18
      %21 = dma.hbm_to_vmem [thread:$0]  %s17, 32, %s19, [#allocation3]
    $region5: #{tpu_custom_call.1} parent=1 // pred_fallthru
      _
    // Predicated region
    $region6: #{tpu_custom_call.1} parent=1 // pred_check
      _
    $region7: #{tpu_custom_call.1} parent=1 // pred_check_branch
      %23 = sbr.rel (0) target = $region9
    $region8: #{tpu_custom_call.1} parent=1 // pred_region
      %25 = vsyncadd [#allocation6], 0
      %s27 = sshll.u32 %s1, 4
      %s28 = int_to_ptr.hbm [resolvable:$true] %s27
      %s29 = sshll.u32 [#allocation5], 4
      %s30 = int_to_ptr.vmem [resolvable:$true] %s29
      %32 = dma.hbm_to_vmem [thread:$0]  %s28, 128, %s30, [#allocation6]
    $region9: #{tpu_custom_call.1} parent=1 // pred_fallthru
      _
    // Predicated region
    $region10: #{tpu_custom_call.1} parent=1 // pred_check
      _
    $region11: #{tpu_custom_call.1} parent=1 // pred_check_branch
      %34 = sbr.rel (0) target = $region13
    $region12: #{tpu_custom_call.1} parent=1 // pred_region
      _
    $region13: #{tpu_custom_call.1} parent=1 // pred_fallthru
      _
    // Predicated region
    $region14: #{tpu_custom_call.1} parent=1 // pred_check
      _
    $region15: #{tpu_custom_call.1} parent=1 // pred_check_branch
      %36 = sbr.rel (0) target = $region17
    $region16: #{tpu_custom_call.1} parent=1 // pred_region
      %38 = dma.done [#allocation3], 32
    $region17: #{tpu_custom_call.1} parent=1 // pred_fallthru
      _
    // Predicated region
    $region18: #{tpu_custom_call.1} parent=1 // pred_check
      _
    $region19: #{tpu_custom_call.1} parent=1 // pred_check_branch
      %40 = sbr.rel (0) target = $region21
    $region20: #{tpu_custom_call.1} parent=1 // pred_region
      %42 = dma.done [#allocation6], 128
    $region21: #{tpu_custom_call.1} parent=1 // pred_fallthru
      _
    %v43 = vld [vmem:[#allocation2] sm:$0x3]
    %v44 = vld [vmem:[#allocation5] sm:$0xff]
    %v45 = vld [vmem:[%s2] sm:$0x1]
    %v47 = vperm.slane %v45, 0
    %vm49 = vcmask 523264
    %v51 = vsel %vm49, %v43, 0
    %v54 = vsel %vm49, %v44, 0
    %56 = vmatpush.xpose.msra.mxu0 0.0
    %57 = vmatpush.xpose.msra.mxu0 0.0
    %58 = vmatpush.xpose.msra.mxu0 0.0
    %59 = vmatpush.xpose.msra.mxu0 0.0
    %60 = vmatpush.xpose.msra.mxu0 0.0
    %61 = vmatpush.xpose.msra.mxu0 0.0
    %62 = vmatpush.xpose.msra.mxu0 0.0
    %63 = vmatpush.xpose.msra.mxu0 0.0
    %64 = vmatpush.xpose.msra.mxu0 0.0
    %65 = vmatpush.xpose.msra.mxu0 0.0
    %66 = vmatpush.xpose.msra.mxu0 0.0
    %67 = vmatpush.xpose.msra.mxu0 0.0
    %68 = vmatpush.xpose.msra.mxu0 0.0
    %69 = vmatpush.xpose.msra.mxu0 0.0
    %70 = vmatpush.xpose.msra.mxu0 0.0
    %71 = vmatpush.xpose.msra.mxu0 %v54
    %72 = vmatmul.f32.gmra.mxu0 %v51
    %v73 = vpop.f32.mrf.mxu0
    %v74 = vadd.f32 %v47, %v73
    %75 = vdwg.mxu0
    %vm76 = vcmask 58368
    %77 = vst.msk [vmem:[#allocation7] sm:$0x3] %vm76, %v74
    // Predicated region
    $region22: #{tpu_custom_call.1} parent=1 // pred_check
      _
    $region23: #{tpu_custom_call.1} parent=1 // pred_check_branch
      %79 = sbr.rel (0) target = $region25
    $region24: #{tpu_custom_call.1} parent=1 // pred_region
      %81 = vsyncadd [#allocation4], 0
      %s83 = sshll.u32 [#allocation7], 4
      %s84 = int_to_ptr.vmem [resolvable:$true] %s83
      %s85 = sshll.u32 %s3, 4
      %s86 = int_to_ptr.hbm [resolvable:$true] %s85
      %88 = dma.vmem_to_hbm [thread:$0]  %s84, 32, %s86, [#allocation4]
    $region25: #{tpu_custom_call.1} parent=1 // pred_fallthru
      _
    // Predicated region
    $region26: #{tpu_custom_call.1} parent=1 // pred_check
      _
    $region27: #{tpu_custom_call.1} parent=1 // pred_check_branch
      %90 = sbr.rel (0) target = $region29
    $region28: #{tpu_custom_call.1} parent=1 // pred_region
      %92 = dma.done [#allocation4], 32
    $region29: #{tpu_custom_call.1} parent=1 // pred_fallthru
      _
    %93 = vsyncpa [#allocation3], 1
    %94 = vsyncpa [#allocation6], 1
    %95 = vsyncpa [#allocation4], 1

</llo_original>
